<compile_context>
chip_gen: v6e
topology: v6e:2x2x1
jax: 0.10.0
libtpu: 0.0.40
codegen_flags: <defaults>
</compile_context>

<pallas_src>
import functools

import jax
import jax.numpy as jnp
from jax.experimental import pallas as pl
from jax.experimental.pallas import tpu as pltpu

LANE = 128
TB_CAP = 512  # batch-tile cap (multiple of 16); ~85% of HBM roofline vs ~63% @256


def _round_up(x, m):
    return ((x + m - 1) // m) * m


# ---------------------------------------------------------------------------
# Pallas kernel: one batch tile per grid step; static loop over N stacked nets
# (weights are VMEM-resident across batch tiles via constant index_maps).
# ---------------------------------------------------------------------------
def mazenet_kernel(x_ref, w1_ref, b1_ref, w2_ref, b2_ref, wf_ref, bf_ref, o_ref):
    # Cast activations to bf16 only as matmul inputs (MXU-native rate); bias
    # add + ReLU stay on the f32 accumulator (v5e-friendly, no bf16 VPU needed).
    x = x_ref[...].astype(jnp.bfloat16)
    n_nets = w1_ref.shape[0]
    for n in range(n_nets):  # static unroll: N is 1 or 2
        h = jnp.dot(x, w1_ref[n], preferred_element_type=jnp.float32) + b1_ref[n]
        h = jnp.maximum(h, 0.0).astype(jnp.bfloat16)
        h = jnp.dot(h, w2_ref[n], preferred_element_type=jnp.float32) + b2_ref[n]
        h = jnp.maximum(h, 0.0).astype(jnp.bfloat16)
        out = jnp.dot(h, wf_ref[n], preferred_element_type=jnp.float32) + bf_ref[n]
        o_ref[n] = out.astype(o_ref.dtype)


# ---------------------------------------------------------------------------
# Jitted forward: flatten -> pad -> pallas_call -> de-pad slice (all fused).
# params = (W1, b1, W2, b2, Wf, bf), each with a leading net axis N:
#   W1/W2: (N, F_pad, F_pad) bf16, Wf: (N, F_pad, A_pad) bf16
#   b1/b2: (N, 1, F_pad) f32,      bf: (N, 1, A_pad) f32
# Returns (N, B, act_dim) float32.
# ---------------------------------------------------------------------------
@functools.partial(jax.jit, static_argnums=(2,))
def mazenet_forward(state, params, act_dim):
    w1, b1, w2, b2, wf, bf = params
    n_nets, f_pad, _ = w1.shape
    a_pad = wf.shape[-1]

    # nn.Flatten semantics.
    x = state.reshape(state.shape[0], -1).astype(jnp.float32)
    b, f = x.shape

    # Zero-pad feature columns to the lane-padded weight fan-in (exact: padded
    # weight rows are zero).
    if f_pad != f:
        x = jnp.pad(x, ((0, 0), (0, f_pad - f)))

    # Batch tile: multiple of 16 (bf16 sublane packing), capped at TB_CAP;
    # clamped to round_up(B, 16) so small batches are not over-padded.
    tb = min(TB_CAP, _round_up(b, 16))
    b_padded = _round_up(b, tb)
    if b_padded != b:
        x = jnp.pad(x, ((0, b_padded - b), (0, 0)))

    grid = (b_padded // tb,)

    param_bytes = sum(p.size * jnp.dtype(p.dtype).itemsize for p in params)
    cost = pl.CostEstimate(
        flops=2 * n_nets * b_padded * (2 * f_pad * f_pad + f_pad * a_pad),
        transcendentals=0,
        bytes_accessed=(b_padded * f_pad * 4          # x read
                        + param_bytes                 # weights/biases read
                        + n_nets * b_padded * a_pad * 4),  # output write
    )

    out = pl.pallas_call(
        mazenet_kernel,
        out_shape=jax.ShapeDtypeStruct((n_nets, b_padded, a_pad), jnp.float32),
        grid=grid,
        in_specs=[
            # x: one block per batch tile, shared by every net in the kernel.
            pl.BlockSpec((tb, f_pad), lambda i: (i, 0)),
            # Weights/biases (all nets together): constant index_map along the
            # batch axis -> DMA'd from HBM once, VMEM-resident across tiles.
            pl.BlockSpec((n_nets, f_pad, f_pad), lambda i: (0, 0, 0)),
            pl.BlockSpec((n_nets, 1, f_pad), lambda i: (0, 0, 0)),
            pl.BlockSpec((n_nets, f_pad, f_pad), lambda i: (0, 0, 0)),
            pl.BlockSpec((n_nets, 1, f_pad), lambda i: (0, 0, 0)),
            pl.BlockSpec((n_nets, f_pad, a_pad), lambda i: (0, 0, 0)),
            pl.BlockSpec((n_nets, 1, a_pad), lambda i: (0, 0, 0)),
        ],
        out_specs=pl.BlockSpec((n_nets, tb, a_pad), lambda i: (0, i, 0)),
        compiler_params=pltpu.CompilerParams(
            dimension_semantics=("parallel",)),
        cost_estimate=cost,
    )(x, w1, b1, w2, b2, wf, bf)

    # De-pad rows and head columns; fuses into this jitted program (no extra
    # standalone HBM round-trip op).
    return out[:, :b, :act_dim]


# ---------------------------------------------------------------------------
# Parameter construction (PyTorch nn.Linear default uniform init)
# ---------------------------------------------------------------------------
def _init_linear(key, fan_in, fan_out, pad_in, pad_out):
    # PyTorch default: U(-1/sqrt(fan_in), 1/sqrt(fan_in)) for both W and b.
    kw, kb = jax.random.split(key)
    bound = 1.0 / jnp.sqrt(jnp.float32(fan_in))
    # Stored transposed to (in, out) so the kernel computes x @ W directly.
    w = jax.random.uniform(kw, (fan_in, fan_out), jnp.float32, -bound, bound)
    b = jax.random.uniform(kb, (1, fan_out), jnp.float32, -bound, bound)
    w_p = jnp.pad(w, ((0, pad_in - fan_in), (0, pad_out - fan_out)))
    b_p = jnp.pad(b, ((0, 0), (0, pad_out - fan_out)))
    # Kernel weights in bf16 (matmul inputs); biases stay f32 (f32 accumulator).
    return (w, b), (w_p.astype(jnp.bfloat16), b_p)


def init_mazenet_params(key, feat_dim, act_dim, f_pad, a_pad):
    k1, k2, k3 = jax.random.split(key, 3)
    (w1, b1), (w1p, b1p) = _init_linear(k1, feat_dim, feat_dim, f_pad, f_pad)
    (w2, b2), (w2p, b2p) = _init_linear(k2, feat_dim, feat_dim, f_pad, f_pad)
    (wf, bf), (wfp, bfp) = _init_linear(k3, feat_dim, act_dim, f_pad, a_pad)
    raw = (w1, b1, w2, b2, wf, bf)
    padded = (w1p, b1p, w2p, b2p, wfp, bfp)
    return raw, padded


class DoubleMazeNetPallas:
    """JAX/Pallas equivalent of DoubleMazeNet (online + frozen target copy)."""

    def __init__(self, key, feat_dim, num_blocks=2, act_dim=4):
        assert num_blocks == 2, "kernel is specialized to num_blocks=2"
        self.feat_dim = feat_dim
        self.act_dim = act_dim
        self.f_pad = _round_up(feat_dim, LANE)
        self.a_pad = _round_up(act_dim, LANE)

        raw, padded = init_mazenet_params(
            key, feat_dim, act_dim, self.f_pad, self.a_pad)
        # target = deepcopy(online): identical parameters.
        # TODO(synk): target's requires_grad=False is an autograd-only detail
        # with no forward-pass equivalent.
        raw_t = jax.tree_util.tree_map(jnp.array, raw)
        padded_t = jax.tree_util.tree_map(jnp.array, padded)

        self.raw_online, self.raw_target = raw, raw_t
        # Pre-built per-net and stacked parameter pytrees (leading net axis);
        # no per-call slicing of device arrays.
        self.params_online = jax.tree_util.tree_map(lambda p: p[None], padded)
        self.params_target = jax.tree_util.tree_map(lambda p: p[None], padded_t)
        self.params_both = jax.tree_util.tree_map(
            lambda a, b: jnp.stack([a, b]), padded, padded_t)

    def __call__(self, state, net="online"):
        params = self.params_online if net == "online" else self.params_target
        return mazenet_forward(state, params, self.act_dim)[0]

    def forward_both(self, state):
        """Compute online AND target outputs in one fused kernel launch."""
        out = mazenet_forward(state, self.params_both, self.act_dim)
        return out[0], out[1]


# ---------------------------------------------------------------------------
# Pure-JAX reference (same bf16-input / f32-accumulate recipe as the kernel)
# ---------------------------------------------------------------------------
def mazenet_ref(state, raw_params):
    w1, b1, w2, b2, wf, bf = raw_params
    x = state.reshape(state.shape[0], -1).astype(jnp.bfloat16)
    h = jnp.dot(x, w1.astype(jnp.bfloat16), preferred_element_type=jnp.float32) + b1
    h = jnp.maximum(h, 0.0).astype(jnp.bfloat16)
    h = jnp.dot(h, w2.astype(jnp.bfloat16), preferred_element_type=jnp.float32) + b2
    h = jnp.maximum(h, 0.0).astype(jnp.bfloat16)
    return jnp.dot(h, wf.astype(jnp.bfloat16), preferred_element_type=jnp.float32) + bf


if __name__ == "__main__":
    key = jax.random.PRNGKey(0)
    k_param, k_state = jax.random.split(key)

    # Small NCHW maze state.  feat_dim = 4*7*7 = 196 is deliberately NOT a
    # multiple of 128 and batch = 37 not a multiple of 16, exercising both the
    # feature-lane padding and the batch padding paths.
    B, C, H, W = 37, 4, 7, 7
    feat_dim = C * H * W
    act_dim = 4
    state = jax.random.normal(k_state, (B, C, H, W), jnp.float32)

    net = DoubleMazeNetPallas(k_param, feat_dim, num_blocks=2, act_dim=act_dim)

    # Module-semantics path (one net at a time).
    out_online = jax.block_until_ready(net(state, net="online"))
    out_target = jax.block_until_ready(net(state, net="target"))
    # Fused double-net path (both nets, one launch, x read from HBM once).
    both_online, both_target = jax.block_until_ready(net.forward_both(state))

    # Verify against pure-JAX reference (same bf16/f32 precision recipe).
    ref_online = mazenet_ref(state, net.raw_online)
    ref_target = mazenet_ref(state, net.raw_target)

    assert out_online.shape == (B, act_dim)
    assert out_target.shape == (B, act_dim)
    assert jnp.allclose(out_online, ref_online, atol=1e-2, rtol=1e-2)
    assert jnp.allclose(out_target, ref_target, atol=1e-2, rtol=1e-2)
    assert jnp.allclose(both_online, ref_online, atol=1e-2, rtol=1e-2)
    assert jnp.allclose(both_target, ref_target, atol=1e-2, rtol=1e-2)
    # online and target share identical (deep-copied) weights.
    assert jnp.allclose(out_online, out_target)

    print("KERNEL_OK")
</pallas_src>

<mosaic_0001>
module attributes {stable_mosaic.version = 11 : i64} {
  func.func @mazenet_kernel(%arg0: i32, %arg1: memref<48x256xf32, #tpu.memory_space<vmem>>, %arg2: memref<1x256x256xbf16, #tpu.memory_space<vmem>>, %arg3: memref<1x1x256xf32, #tpu.memory_space<vmem>>, %arg4: memref<1x256x256xbf16, #tpu.memory_space<vmem>>, %arg5: memref<1x1x256xf32, #tpu.memory_space<vmem>>, %arg6: memref<1x256x128xbf16, #tpu.memory_space<vmem>>, %arg7: memref<1x1x128xf32, #tpu.memory_space<vmem>>, %arg8: memref<1x48x128xf32, #tpu.memory_space<vmem>>) attributes {dimension_semantics = [#tpu.dimension_semantics<parallel>], iteration_bounds = array<i64: 1>, scalar_prefetch = 0 : i64, scratch_operands = 0 : i64, tpu.core_type = #tpu.core_type<tc>, window_params = [{transform_indices = @transform_0, window_bounds = array<i64: 48, 256>}, {pipeline_mode = #tpu.pipeline_mode<synchronous>, transform_indices = @transform_1, window_bounds = array<i64: 1, 256, 256>}, {pipeline_mode = #tpu.pipeline_mode<synchronous>, transform_indices = @transform_2, window_bounds = array<i64: 1, 1, 256>}, {pipeline_mode = #tpu.pipeline_mode<synchronous>, transform_indices = @transform_3, window_bounds = array<i64: 1, 256, 256>}, {pipeline_mode = #tpu.pipeline_mode<synchronous>, transform_indices = @transform_4, window_bounds = array<i64: 1, 1, 256>}, {pipeline_mode = #tpu.pipeline_mode<synchronous>, transform_indices = @transform_5, window_bounds = array<i64: 1, 256, 128>}, {pipeline_mode = #tpu.pipeline_mode<synchronous>, transform_indices = @transform_6, window_bounds = array<i64: 1, 1, 128>}, {transform_indices = @transform_7, window_bounds = array<i64: 1, 48, 128>}]} {
    %c0 = arith.constant 0 : index
    %c0_0 = arith.constant 0 : index
    %0 = vector.load %arg1[%c0, %c0_0] : memref<48x256xf32, #tpu.memory_space<vmem>>, vector<48x256xf32>
    %1 = arith.truncf %0 : vector<48x256xf32> to vector<48x256xbf16>
    %c0_1 = arith.constant 0 : index
    %c0_2 = arith.constant 0 : index
    %c0_3 = arith.constant 0 : index
    %2 = vector.load %arg2[%c0_1, %c0_2, %c0_3] : memref<1x256x256xbf16, #tpu.memory_space<vmem>>, vector<1x256x256xbf16>
    %3 = vector.shape_cast %2 : vector<1x256x256xbf16> to vector<256x256xbf16>
    %cst = arith.constant dense<0.000000e+00> : vector<48x256xf32>
    %4 = tpu.matmul %1, %3, %cst {dimension_numbers = #tpu.dot_dimension_numbers<[1], [0], [0], [1], [0, 0, 1, 1], [], []>} : vector<48x256xbf16>, vector<256x256xbf16>, vector<48x256xf32> -> vector<48x256xf32>
    %c0_4 = arith.constant 0 : index
    %c0_5 = arith.constant 0 : index
    %c0_6 = arith.constant 0 : index
    %5 = vector.load %arg3[%c0_4, %c0_5, %c0_6] : memref<1x1x256xf32, #tpu.memory_space<vmem>>, vector<1x1x256xf32>
    %6 = vector.shape_cast %5 : vector<1x1x256xf32> to vector<1x256xf32>
    %7 = vector.broadcast %6 : vector<1x256xf32> to vector<48x256xf32>
    %8 = arith.addf %4, %7 : vector<48x256xf32>
    %cst_7 = arith.constant 0.000000e+00 : f32
    %9 = vector.broadcast %cst_7 : f32 to vector<48x256xf32>
    %10 = arith.maximumf %8, %9 : vector<48x256xf32>
    %11 = arith.truncf %10 : vector<48x256xf32> to vector<48x256xbf16>
    %c0_8 = arith.constant 0 : index
    %c0_9 = arith.constant 0 : index
    %c0_10 = arith.constant 0 : index
    %12 = vector.load %arg4[%c0_8, %c0_9, %c0_10] : memref<1x256x256xbf16, #tpu.memory_space<vmem>>, vector<1x256x256xbf16>
    %13 = vector.shape_cast %12 : vector<1x256x256xbf16> to vector<256x256xbf16>
    %cst_11 = arith.constant dense<0.000000e+00> : vector<48x256xf32>
    %14 = tpu.matmul %11, %13, %cst_11 {dimension_numbers = #tpu.dot_dimension_numbers<[1], [0], [0], [1], [0, 0, 1, 1], [], []>} : vector<48x256xbf16>, vector<256x256xbf16>, vector<48x256xf32> -> vector<48x256xf32>
    %c0_12 = arith.constant 0 : index
    %c0_13 = arith.constant 0 : index
    %c0_14 = arith.constant 0 : index
    %15 = vector.load %arg5[%c0_12, %c0_13, %c0_14] : memref<1x1x256xf32, #tpu.memory_space<vmem>>, vector<1x1x256xf32>
    %16 = vector.shape_cast %15 : vector<1x1x256xf32> to vector<1x256xf32>
    %17 = vector.broadcast %16 : vector<1x256xf32> to vector<48x256xf32>
    %18 = arith.addf %14, %17 : vector<48x256xf32>
    %cst_15 = arith.constant 0.000000e+00 : f32
    %19 = vector.broadcast %cst_15 : f32 to vector<48x256xf32>
    %20 = arith.maximumf %18, %19 : vector<48x256xf32>
    %21 = arith.truncf %20 : vector<48x256xf32> to vector<48x256xbf16>
    %c0_16 = arith.constant 0 : index
    %c0_17 = arith.constant 0 : index
    %c0_18 = arith.constant 0 : index
    %22 = vector.load %arg6[%c0_16, %c0_17, %c0_18] : memref<1x256x128xbf16, #tpu.memory_space<vmem>>, vector<1x256x128xbf16>
    %23 = vector.shape_cast %22 : vector<1x256x128xbf16> to vector<256x128xbf16>
    %cst_19 = arith.constant dense<0.000000e+00> : vector<48x128xf32>
    %24 = tpu.matmul %21, %23, %cst_19 {dimension_numbers = #tpu.dot_dimension_numbers<[1], [0], [0], [1], [0, 0, 1, 1], [], []>} : vector<48x256xbf16>, vector<256x128xbf16>, vector<48x128xf32> -> vector<48x128xf32>
    %c0_20 = arith.constant 0 : index
    %c0_21 = arith.constant 0 : index
    %c0_22 = arith.constant 0 : index
    %25 = vector.load %arg7[%c0_20, %c0_21, %c0_22] : memref<1x1x128xf32, #tpu.memory_space<vmem>>, vector<1x1x128xf32>
    %26 = vector.shape_cast %25 : vector<1x1x128xf32> to vector<1x128xf32>
    %27 = vector.broadcast %26 : vector<1x128xf32> to vector<48x128xf32>
    %28 = arith.addf %24, %27 : vector<48x128xf32>
    %c0_23 = arith.constant 0 : index
    %c0_24 = arith.constant 0 : index
    %c0_25 = arith.constant 0 : index
    %29 = vector.load %arg8[%c0_23, %c0_24, %c0_25] : memref<1x48x128xf32, #tpu.memory_space<vmem>>, vector<1x48x128xf32>
    %30 = vector.shape_cast %29 : vector<1x48x128xf32> to vector<48x128xf32>
    %31 = vector.shape_cast %28 : vector<48x128xf32> to vector<1x48x128xf32>
    tpu.vector_store %arg8[%c0_23, %c0_24, %c0_25], %31 {strides = array<i32>} : memref<1x48x128xf32, #tpu.memory_space<vmem>>, vector<1x48x128xf32>,
    return
  }
  func.func @transform_0(%arg0: i32) -> (i32, i32) {
    %c0_i32 = arith.constant 0 : i32
    %c0_i32_0 = arith.constant 0 : i32
    return %arg0, %c0_i32 : i32, i32
  }
  func.func @transform_1(%arg0: i32) -> (i32, i32, i32) {
    %c0_i32 = arith.constant 0 : i32
    %c0_i32_0 = arith.constant 0 : i32
    %c0_i32_1 = arith.constant 0 : i32
    %c0_i32_2 = arith.constant 0 : i32
    return %c0_i32, %c0_i32_0, %c0_i32_1 : i32, i32, i32
  }
  func.func @transform_2(%arg0: i32) -> (i32, i32, i32) {
    %c0_i32 = arith.constant 0 : i32
    %c0_i32_0 = arith.constant 0 : i32
    %c0_i32_1 = arith.constant 0 : i32
    %c0_i32_2 = arith.constant 0 : i32
    return %c0_i32, %c0_i32_0, %c0_i32_1 : i32, i32, i32
  }
  func.func @transform_3(%arg0: i32) -> (i32, i32, i32) {
    %c0_i32 = arith.constant 0 : i32
    %c0_i32_0 = arith.constant 0 : i32
    %c0_i32_1 = arith.constant 0 : i32
    %c0_i32_2 = arith.constant 0 : i32
    return %c0_i32, %c0_i32_0, %c0_i32_1 : i32, i32, i32
  }
  func.func @transform_4(%arg0: i32) -> (i32, i32, i32) {
    %c0_i32 = arith.constant 0 : i32
    %c0_i32_0 = arith.constant 0 : i32
    %c0_i32_1 = arith.constant 0 : i32
    %c0_i32_2 = arith.constant 0 : i32
    return %c0_i32, %c0_i32_0, %c0_i32_1 : i32, i32, i32
  }
  func.func @transform_5(%arg0: i32) -> (i32, i32, i32) {
    %c0_i32 = arith.constant 0 : i32
    %c0_i32_0 = arith.constant 0 : i32
    %c0_i32_1 = arith.constant 0 : i32
    %c0_i32_2 = arith.constant 0 : i32
    return %c0_i32, %c0_i32_0, %c0_i32_1 : i32, i32, i32
  }
  func.func @transform_6(%arg0: i32) -> (i32, i32, i32) {
    %c0_i32 = arith.constant 0 : i32
    %c0_i32_0 = arith.constant 0 : i32
    %c0_i32_1 = arith.constant 0 : i32
    %c0_i32_2 = arith.constant 0 : i32
    return %c0_i32, %c0_i32_0, %c0_i32_1 : i32, i32, i32
  }
  func.func @transform_7(%arg0: i32) -> (i32, i32, i32) {
    %c0_i32 = arith.constant 0 : i32
    %c0_i32_0 = arith.constant 0 : i32
    %c0_i32_1 = arith.constant 0 : i32
    return %c0_i32, %arg0, %c0_i32_0 : i32, i32, i32
  }
}

</mosaic_0001>

<llo_original>
// kernel: mazenet_forward.1
$region0: #{mazenet_forward.1}
  #allocation0 [shape = 'u32[]', space=smem, size = 0x4, offset = 0x4, fixed_abs, tag = 'smem constant byte address 0x4 - core index']
  #allocation1 [shape = 'u32[144,128]{1,0:T(1,128)}', space=vmem, size = 0x12000, scoped, tag = 'internal scratch']
  %s0 = inlined_call_operand.vmem [shape: f32[48,256], index: 0, kind: input, shape index: {}]
  %s1 = inlined_call_operand.vmem [shape: bf16[1,256,256], index: 1, kind: input, shape index: {}]
  %s2 = inlined_call_operand.vmem [shape: f32[1,1,256], index: 2, kind: input, shape index: {}]
  %s3 = inlined_call_operand.vmem [shape: bf16[1,256,256], index: 3, kind: input, shape index: {}]
  %s4 = inlined_call_operand.vmem [shape: f32[1,1,256], index: 4, kind: input, shape index: {}]
  %s5 = inlined_call_operand.vmem [shape: bf16[1,256,128], index: 5, kind: input, shape index: {}]
  %s6 = inlined_call_operand.vmem [shape: f32[1,1,128], index: 6, kind: input, shape index: {}]
  %s7 = inlined_call_operand.vmem [shape: f32[1,48,128], index: 7, kind: output, shape index: {}]
  %s8 = sld [smem:[#allocation0]]
  $region38: #{mazenet_forward.1} parent=0
    _
  %s10 = ssub.s32 1, %s8
  %s11 = scalar_select 0, %s10, %s8
  // Predicated region
  $region2: #{mazenet_forward.1} parent=0 // pred_check
    _
  $region3: #{mazenet_forward.1} parent=0 // pred_check_branch
    %13 = sbr.rel (0) target = $region5
  $region4: #{mazenet_forward.1} parent=0 // pred_region
    _
  $region5: #{mazenet_forward.1} parent=0 // pred_fallthru
    _
  // Predicated region
  $region6: #{mazenet_forward.1} parent=0 // pred_check
    _
  $region7: #{mazenet_forward.1} parent=0 // pred_check_branch
    %15 = sbr.rel (0) target = $region9
  $region8: #{mazenet_forward.1} parent=0 // pred_region
    _
  $region9: #{mazenet_forward.1} parent=0 // pred_fallthru
    _
  // Predicated region
  $region10: #{mazenet_forward.1} parent=0 // pred_check
    _
  $region11: #{mazenet_forward.1} parent=0 // pred_check_branch
    %17 = sbr.rel (0) target = $region13
  $region12: #{mazenet_forward.1} parent=0 // pred_region
    _
  $region13: #{mazenet_forward.1} parent=0 // pred_fallthru
    _
  // Predicated region
  $region14: #{mazenet_forward.1} parent=0 // pred_check
    _
  $region15: #{mazenet_forward.1} parent=0 // pred_check_branch
    %19 = sbr.rel (0) target = $region17
  $region16: #{mazenet_forward.1} parent=0 // pred_region
    _
  $region17: #{mazenet_forward.1} parent=0 // pred_fallthru
    _
  // Predicated region
  $region18: #{mazenet_forward.1} parent=0 // pred_check
    _
  $region19: #{mazenet_forward.1} parent=0 // pred_check_branch
    %21 = sbr.rel (0) target = $region21
  $region20: #{mazenet_forward.1} parent=0 // pred_region
    _
  $region21: #{mazenet_forward.1} parent=0 // pred_fallthru
    _
  // Predicated region
  $region22: #{mazenet_forward.1} parent=0 // pred_check
    _
  $region23: #{mazenet_forward.1} parent=0 // pred_check_branch
    %23 = sbr.rel (0) target = $region25
  $region24: #{mazenet_forward.1} parent=0 // pred_region
    _
  $region25: #{mazenet_forward.1} parent=0 // pred_fallthru
    _
  // Predicated region
  $region26: #{mazenet_forward.1} parent=0 // pred_check
    _
  $region27: #{mazenet_forward.1} parent=0 // pred_check_branch
    %25 = sbr.rel (0) target = $region29
  $region28: #{mazenet_forward.1} parent=0 // pred_region
    _
  $region29: #{mazenet_forward.1} parent=0 // pred_fallthru
    _
  %v27 = vld [vmem:[%s0] sm:$0xff]
  %v28 = vld [vmem:[%s0 + $0x8] sm:$0xff]
  %v29 = vld [vmem:[%s0 + $0x10] sm:$0xff]
  %v30 = vld [vmem:[%s0 + $0x18] sm:$0xff]
  %v31 = vld [vmem:[%s0 + $0x20] sm:$0xff]
  %v32 = vld [vmem:[%s0 + $0x28] sm:$0xff]
  %v33 = vld [vmem:[%s0 + $0x30] sm:$0xff]
  %v34 = vld [vmem:[%s0 + $0x38] sm:$0xff]
  %v35 = vld [vmem:[%s0 + $0x40] sm:$0xff]
  %v36 = vld [vmem:[%s0 + $0x48] sm:$0xff]
  %v37 = vld [vmem:[%s0 + $0x50] sm:$0xff]
  %v38 = vld [vmem:[%s0 + $0x58] sm:$0xff]
  %v39 = vpack.c.bf16 %v29, %v27
  %v40 = vpack.c.bf16 %v30, %v28
  %v41 = vpack.c.bf16 %v33, %v31
  %v42 = vpack.c.bf16 %v34, %v32
  %v43 = vpack.c.bf16 %v37, %v35
  %v44 = vpack.c.bf16 %v38, %v36
  %v45 = vld [vmem:[%s1] sm:$0xff]
  %v46 = vld [vmem:[%s1 + $0x8] sm:$0xff]
  %v47 = vld [vmem:[%s1 + $0x10] sm:$0xff]
  %v48 = vld [vmem:[%s1 + $0x18] sm:$0xff]
  %v49 = vld [vmem:[%s1 + $0x20] sm:$0xff]
  %v50 = vld [vmem:[%s1 + $0x28] sm:$0xff]
  %v51 = vld [vmem:[%s1 + $0x30] sm:$0xff]
  %v52 = vld [vmem:[%s1 + $0x38] sm:$0xff]
  %v53 = vld [vmem:[%s1 + $0x40] sm:$0xff]
  %v54 = vld [vmem:[%s1 + $0x48] sm:$0xff]
  %v55 = vld [vmem:[%s1 + $0x50] sm:$0xff]
  %v56 = vld [vmem:[%s1 + $0x58] sm:$0xff]
  %v57 = vld [vmem:[%s1 + $0x60] sm:$0xff]
  %v58 = vld [vmem:[%s1 + $0x68] sm:$0xff]
  %v59 = vld [vmem:[%s1 + $0x70] sm:$0xff]
  %v60 = vld [vmem:[%s1 + $0x78] sm:$0xff]
  %v61 = vld [vmem:[%s1 + $0x80] sm:$0xff]
  %v62 = vld [vmem:[%s1 + $0x88] sm:$0xff]
  %v63 = vld [vmem:[%s1 + $0x90] sm:$0xff]
  %v64 = vld [vmem:[%s1 + $0x98] sm:$0xff]
  %v65 = vld [vmem:[%s1 + $0xa0] sm:$0xff]
  %v66 = vld [vmem:[%s1 + $0xa8] sm:$0xff]
  %v67 = vld [vmem:[%s1 + $0xb0] sm:$0xff]
  %v68 = vld [vmem:[%s1 + $0xb8] sm:$0xff]
  %v69 = vld [vmem:[%s1 + $0xc0] sm:$0xff]
  %v70 = vld [vmem:[%s1 + $0xc8] sm:$0xff]
  %v71 = vld [vmem:[%s1 + $0xd0] sm:$0xff]
  %v72 = vld [vmem:[%s1 + $0xd8] sm:$0xff]
  %v73 = vld [vmem:[%s1 + $0xe0] sm:$0xff]
  %v74 = vld [vmem:[%s1 + $0xe8] sm:$0xff]
  %v75 = vld [vmem:[%s1 + $0xf0] sm:$0xff]
  %v76 = vld [vmem:[%s1 + $0xf8] sm:$0xff]
  %v77 = vld [vmem:[%s2] sm:$0x3]
  %v79 = vlaneseq
  %v80 = vshrl.u32 %v79, 7
  %v81 = vsub.s32 0, %v80
  %v82 = vrot.slane %v77, %v81
  %v83 = vlaneseq
  %v84 = vshrl.u32 %v83, 7
  %v85 = vsub.s32 1, %v84
  %v86 = vrot.slane %v77, %v85
  %v121 = vunpack.c.l.b16 %v45
  %v122 = vunpack.c.h.b16 %v45
  %v123 = vunpack.c.l.b16 %v46
  %v124 = vunpack.c.h.b16 %v46
  %v125 = vunpack.c.l.b16 %v47
  %v126 = vunpack.c.h.b16 %v47
  %v127 = vunpack.c.l.b16 %v48
  %v128 = vunpack.c.h.b16 %v48
  %v129 = vunpack.c.l.b16 %v49
  %v130 = vunpack.c.h.b16 %v49
  %v131 = vunpack.c.l.b16 %v50
  %v132 = vunpack.c.h.b16 %v50
  %v133 = vunpack.c.l.b16 %v51
  %v134 = vunpack.c.h.b16 %v51
  %v135 = vunpack.c.l.b16 %v52
  %v136 = vunpack.c.h.b16 %v52
  %v137 = vunpack.c.l.b16 %v53
  %v138 = vunpack.c.h.b16 %v53
  %v139 = vunpack.c.l.b16 %v54
  %v140 = vunpack.c.h.b16 %v54
  %v141 = vunpack.c.l.b16 %v55
  %v142 = vunpack.c.h.b16 %v55
  %v143 = vunpack.c.l.b16 %v56
  %v144 = vunpack.c.h.b16 %v56
  %v145 = vunpack.c.l.b16 %v57
  %v146 = vunpack.c.h.b16 %v57
  %v147 = vunpack.c.l.b16 %v58
  %v148 = vunpack.c.h.b16 %v58
  %v149 = vunpack.c.l.b16 %v59
  %v150 = vunpack.c.h.b16 %v59
  %v151 = vunpack.c.l.b16 %v60
  %v152 = vunpack.c.h.b16 %v60
  %v153 = vunpack.c.l.b16 %v61
  %v154 = vunpack.c.h.b16 %v61
  %v155 = vunpack.c.l.b16 %v62
  %v156 = vunpack.c.h.b16 %v62
  %v157 = vunpack.c.l.b16 %v63
  %v158 = vunpack.c.h.b16 %v63
  %v159 = vunpack.c.l.b16 %v64
  %v160 = vunpack.c.h.b16 %v64
  %v161 = vunpack.c.l.b16 %v65
  %v162 = vunpack.c.h.b16 %v65
  %v163 = vunpack.c.l.b16 %v66
  %v164 = vunpack.c.h.b16 %v66
  %v165 = vunpack.c.l.b16 %v67
  %v166 = vunpack.c.h.b16 %v67
  %v167 = vunpack.c.l.b16 %v68
  %v168 = vunpack.c.h.b16 %v68
  %v169 = vunpack.c.l.b16 %v69
  %v170 = vunpack.c.h.b16 %v69
  %v171 = vunpack.c.l.b16 %v70
  %v172 = vunpack.c.h.b16 %v70
  %v173 = vunpack.c.l.b16 %v71
  %v174 = vunpack.c.h.b16 %v71
  %v175 = vunpack.c.l.b16 %v72
  %v176 = vunpack.c.h.b16 %v72
  %v177 = vunpack.c.l.b16 %v73
  %v178 = vunpack.c.h.b16 %v73
  %v179 = vunpack.c.l.b16 %v74
  %v180 = vunpack.c.h.b16 %v74
  %v181 = vunpack.c.l.b16 %v75
  %v182 = vunpack.c.h.b16 %v75
  %v183 = vunpack.c.l.b16 %v76
  %v184 = vunpack.c.h.b16 %v76
  %v185 = vpack.c.b16 %v123, %v121
  %v186 = vpack.c.b16 %v124, %v122
  %v187 = vpack.c.b16 %v127, %v125
  %v188 = vpack.c.b16 %v128, %v126
  %v189 = vpack.c.b16 %v131, %v129
  %v190 = vpack.c.b16 %v132, %v130
  %v191 = vpack.c.b16 %v135, %v133
  %v192 = vpack.c.b16 %v136, %v134
  %v193 = vpack.c.b16 %v139, %v137
  %v194 = vpack.c.b16 %v140, %v138
  %v195 = vpack.c.b16 %v143, %v141
  %v196 = vpack.c.b16 %v144, %v142
  %v197 = vpack.c.b16 %v147, %v145
  %v198 = vpack.c.b16 %v148, %v146
  %v199 = vpack.c.b16 %v151, %v149
  %v200 = vpack.c.b16 %v152, %v150
  %v201 = vpack.c.b16 %v155, %v153
  %v202 = vpack.c.b16 %v156, %v154
  %v203 = vpack.c.b16 %v159, %v157
  %v204 = vpack.c.b16 %v160, %v158
  %v205 = vpack.c.b16 %v163, %v161
  %v206 = vpack.c.b16 %v164, %v162
  %v207 = vpack.c.b16 %v167, %v165
  %v208 = vpack.c.b16 %v168, %v166
  %v209 = vpack.c.b16 %v171, %v169
  %v210 = vpack.c.b16 %v172, %v170
  %v211 = vpack.c.b16 %v175, %v173
  %v212 = vpack.c.b16 %v176, %v174
  %v213 = vpack.c.b16 %v179, %v177
  %v214 = vpack.c.b16 %v180, %v178
  %v215 = vpack.c.b16 %v183, %v181
  %v216 = vpack.c.b16 %v184, %v182
  %249 = vmatprep.subr.bf16.mxu0 %v200
  %250 = vmatpush1.bf16.msra.mxu0 %v199
  %251 = vmatprep.subr.bf16.mxu0 %v198
  %252 = vmatpush1.bf16.msra.mxu0 %v197
  %253 = vmatprep.subr.bf16.mxu0 %v196
  %254 = vmatpush1.bf16.msra.mxu0 %v195
  %255 = vmatprep.subr.bf16.mxu0 %v194
  %256 = vmatpush1.bf16.msra.mxu0 %v193
  %257 = vmatprep.subr.bf16.mxu0 %v192
  %258 = vmatpush1.bf16.msra.mxu0 %v191
  %259 = vmatprep.subr.bf16.mxu0 %v190
  %260 = vmatpush1.bf16.msra.mxu0 %v189
  %261 = vmatprep.subr.bf16.mxu0 %v188
  %262 = vmatpush1.bf16.msra.mxu0 %v187
  %263 = vmatprep.subr.bf16.mxu0 %v186
  %264 = vmatpush1.bf16.msra.mxu0 %v185
  %265 = vmatprep.subr.bf16.mxu0 %v216
  %266 = vmatpush2.bf16.msra.mxu0 %v215
  %267 = vmatprep.subr.bf16.mxu0 %v214
  %268 = vmatpush2.bf16.msra.mxu0 %v213
  %269 = vmatprep.subr.bf16.mxu0 %v212
  %270 = vmatpush2.bf16.msra.mxu0 %v211
  %271 = vmatprep.subr.bf16.mxu0 %v210
  %272 = vmatpush2.bf16.msra.mxu0 %v209
  %273 = vmatprep.subr.bf16.mxu0 %v208
  %274 = vmatpush2.bf16.msra.mxu0 %v207
  %275 = vmatprep.subr.bf16.mxu0 %v206
  %276 = vmatpush2.bf16.msra.mxu0 %v205
  %277 = vmatprep.subr.bf16.mxu0 %v204
  %278 = vmatpush2.bf16.msra.mxu0 %v203
  %279 = vmatprep.subr.bf16.mxu0 %v202
  %280 = vmatpush2.bf16.msra.mxu0 %v201
  %281 = vmatprep.mubr.bf16.mxu0 %v40
  %282 = vmatmul.mubr.bf16.gmra.mxu0 %v39
  %v283 = vpop.f32.mrf.mxu0
  %v284 = vadd.f32 %v82, %v283
  %v285 = vpop.f32.mrf.mxu0
  %v286 = vadd.f32 %v86, %v285
  %v287 = vpop.f32.mrf.mxu0
  %v288 = vadd.f32 %v82, %v287
  %v289 = vpop.f32.mrf.mxu0
  %v290 = vadd.f32 %v86, %v289
  %291 = vmatprep.mubr.bf16.mxu0 %v42
  %292 = vmatmul.mubr.bf16.gmra.mxu0 %v41
  %v293 = vpop.f32.mrf.mxu0
  %v294 = vadd.f32 %v82, %v293
  %v295 = vpop.f32.mrf.mxu0
  %v296 = vadd.f32 %v86, %v295
  %v297 = vpop.f32.mrf.mxu0
  %v298 = vadd.f32 %v82, %v297
  %v299 = vpop.f32.mrf.mxu0
  %v300 = vadd.f32 %v86, %v299
  %301 = vmatprep.mubr.bf16.mxu0 %v44
  %302 = vmatmul.mubr.bf16.gmra.mxu0 %v43
  %v303 = vpop.f32.mrf.mxu0
  %v304 = vadd.f32 %v82, %v303
  %v305 = vpop.f32.mrf.mxu0
  %v306 = vadd.f32 %v86, %v305
  %v307 = vpop.f32.mrf.mxu0
  %v308 = vadd.f32 %v82, %v307
  %v309 = vpop.f32.mrf.mxu0
  %v310 = vadd.f32 %v86, %v309
  %311 = vdwg.mxu0
  %v312 = vmax.f32 %v284, 0.0
  %v313 = vmax.f32 %v286, 0.0
  %v314 = vmax.f32 %v288, 0.0
  %v315 = vmax.f32 %v290, 0.0
  %v316 = vmax.f32 %v294, 0.0
  %v317 = vmax.f32 %v296, 0.0
  %v318 = vmax.f32 %v298, 0.0
  %v319 = vmax.f32 %v300, 0.0
  %v320 = vmax.f32 %v304, 0.0
  %v321 = vmax.f32 %v306, 0.0
  %v322 = vmax.f32 %v308, 0.0
  %v323 = vmax.f32 %v310, 0.0
  %v324 = vpack.c.bf16 %v314, %v312
  %v325 = vpack.c.bf16 %v315, %v313
  %v326 = vpack.c.bf16 %v318, %v316
  %v327 = vpack.c.bf16 %v319, %v317
  %v328 = vpack.c.bf16 %v322, %v320
  %v329 = vpack.c.bf16 %v323, %v321
  %v330 = vld [vmem:[%s3] sm:$0xff]
  %v331 = vld [vmem:[%s3 + $0x8] sm:$0xff]
  %v332 = vld [vmem:[%s3 + $0x10] sm:$0xff]
  %v333 = vld [vmem:[%s3 + $0x18] sm:$0xff]
  %v334 = vld [vmem:[%s3 + $0x20] sm:$0xff]
  %v335 = vld [vmem:[%s3 + $0x28] sm:$0xff]
  %v336 = vld [vmem:[%s3 + $0x30] sm:$0xff]
  %v337 = vld [vmem:[%s3 + $0x38] sm:$0xff]
  %v338 = vld [vmem:[%s3 + $0x40] sm:$0xff]
  %v339 = vld [vmem:[%s3 + $0x48] sm:$0xff]
  %v340 = vld [vmem:[%s3 + $0x50] sm:$0xff]
  %v341 = vld [vmem:[%s3 + $0x58] sm:$0xff]
  %v342 = vld [vmem:[%s3 + $0x60] sm:$0xff]
  %v343 = vld [vmem:[%s3 + $0x68] sm:$0xff]
  %v344 = vld [vmem:[%s3 + $0x70] sm:$0xff]
  %v345 = vld [vmem:[%s3 + $0x78] sm:$0xff]
  %v346 = vld [vmem:[%s3 + $0x80] sm:$0xff]
  %v347 = vld [vmem:[%s3 + $0x88] sm:$0xff]
  %v348 = vld [vmem:[%s3 + $0x90] sm:$0xff]
  %v349 = vld [vmem:[%s3 + $0x98] sm:$0xff]
  %v350 = vld [vmem:[%s3 + $0xa0] sm:$0xff]
  %v351 = vld [vmem:[%s3 + $0xa8] sm:$0xff]
  %v352 = vld [vmem:[%s3 + $0xb0] sm:$0xff]
  %v353 = vld [vmem:[%s3 + $0xb8] sm:$0xff]
  %v354 = vld [vmem:[%s3 + $0xc0] sm:$0xff]
  %v355 = vld [vmem:[%s3 + $0xc8] sm:$0xff]
  %v356 = vld [vmem:[%s3 + $0xd0] sm:$0xff]
  %v357 = vld [vmem:[%s3 + $0xd8] sm:$0xff]
  %v358 = vld [vmem:[%s3 + $0xe0] sm:$0xff]
  %v359 = vld [vmem:[%s3 + $0xe8] sm:$0xff]
  %v360 = vld [vmem:[%s3 + $0xf0] sm:$0xff]
  %v361 = vld [vmem:[%s3 + $0xf8] sm:$0xff]
  %v362 = vld [vmem:[%s4] sm:$0x3]
  %v364 = vlaneseq
  %v365 = vshrl.u32 %v364, 7
  %v366 = vsub.s32 0, %v365
  %v367 = vrot.slane %v362, %v366
  %v368 = vlaneseq
  %v369 = vshrl.u32 %v368, 7
  %v370 = vsub.s32 1, %v369
  %v371 = vrot.slane %v362, %v370
  %v406 = vunpack.c.l.b16 %v330
  %v407 = vunpack.c.h.b16 %v330
  %v408 = vunpack.c.l.b16 %v331
  %v409 = vunpack.c.h.b16 %v331
  %v410 = vunpack.c.l.b16 %v332
  %v411 = vunpack.c.h.b16 %v332
  %v412 = vunpack.c.l.b16 %v333
  %v413 = vunpack.c.h.b16 %v333
  %v414 = vunpack.c.l.b16 %v334
  %v415 = vunpack.c.h.b16 %v334
  %v416 = vunpack.c.l.b16 %v335
  %v417 = vunpack.c.h.b16 %v335
  %v418 = vunpack.c.l.b16 %v336
  %v419 = vunpack.c.h.b16 %v336
  %v420 = vunpack.c.l.b16 %v337
  %v421 = vunpack.c.h.b16 %v337
  %v422 = vunpack.c.l.b16 %v338
  %v423 = vunpack.c.h.b16 %v338
  %v424 = vunpack.c.l.b16 %v339
  %v425 = vunpack.c.h.b16 %v339
  %v426 = vunpack.c.l.b16 %v340
  %v427 = vunpack.c.h.b16 %v340
  %v428 = vunpack.c.l.b16 %v341
  %v429 = vunpack.c.h.b16 %v341
  %v430 = vunpack.c.l.b16 %v342
  %v431 = vunpack.c.h.b16 %v342
  %v432 = vunpack.c.l.b16 %v343
  %v433 = vunpack.c.h.b16 %v343
  %v434 = vunpack.c.l.b16 %v344
  %v435 = vunpack.c.h.b16 %v344
  %v436 = vunpack.c.l.b16 %v345
  %v437 = vunpack.c.h.b16 %v345
  %v438 = vunpack.c.l.b16 %v346
  %v439 = vunpack.c.h.b16 %v346
  %v440 = vunpack.c.l.b16 %v347
  %v441 = vunpack.c.h.b16 %v347
  %v442 = vunpack.c.l.b16 %v348
  %v443 = vunpack.c.h.b16 %v348
  %v444 = vunpack.c.l.b16 %v349
  %v445 = vunpack.c.h.b16 %v349
  %v446 = vunpack.c.l.b16 %v350
  %v447 = vunpack.c.h.b16 %v350
  %v448 = vunpack.c.l.b16 %v351
  %v449 = vunpack.c.h.b16 %v351
  %v450 = vunpack.c.l.b16 %v352
  %v451 = vunpack.c.h.b16 %v352
  %v452 = vunpack.c.l.b16 %v353
  %v453 = vunpack.c.h.b16 %v353
  %v454 = vunpack.c.l.b16 %v354
  %v455 = vunpack.c.h.b16 %v354
  %v456 = vunpack.c.l.b16 %v355
  %v457 = vunpack.c.h.b16 %v355
  %v458 = vunpack.c.l.b16 %v356
  %v459 = vunpack.c.h.b16 %v356
  %v460 = vunpack.c.l.b16 %v357
  %v461 = vunpack.c.h.b16 %v357
  %v462 = vunpack.c.l.b16 %v358
  %v463 = vunpack.c.h.b16 %v358
  %v464 = vunpack.c.l.b16 %v359
  %v465 = vunpack.c.h.b16 %v359
  %v466 = vunpack.c.l.b16 %v360
  %v467 = vunpack.c.h.b16 %v360
  %v468 = vunpack.c.l.b16 %v361
  %v469 = vunpack.c.h.b16 %v361
  %v470 = vpack.c.b16 %v408, %v406
  %v471 = vpack.c.b16 %v409, %v407
  %v472 = vpack.c.b16 %v412, %v410
  %v473 = vpack.c.b16 %v413, %v411
  %v474 = vpack.c.b16 %v416, %v414
  %v475 = vpack.c.b16 %v417, %v415
  %v476 = vpack.c.b16 %v420, %v418
  %v477 = vpack.c.b16 %v421, %v419
  %v478 = vpack.c.b16 %v424, %v422
  %v479 = vpack.c.b16 %v425, %v423
  %v480 = vpack.c.b16 %v428, %v426
  %v481 = vpack.c.b16 %v429, %v427
  %v482 = vpack.c.b16 %v432, %v430
  %v483 = vpack.c.b16 %v433, %v431
  %v484 = vpack.c.b16 %v436, %v434
  %v485 = vpack.c.b16 %v437, %v435
  %v486 = vpack.c.b16 %v440, %v438
  %v487 = vpack.c.b16 %v441, %v439
  %v488 = vpack.c.b16 %v444, %v442
  %v489 = vpack.c.b16 %v445, %v443
  %v490 = vpack.c.b16 %v448, %v446
  %v491 = vpack.c.b16 %v449, %v447
  %v492 = vpack.c.b16 %v452, %v450
  %v493 = vpack.c.b16 %v453, %v451
  %v494 = vpack.c.b16 %v456, %v454
  %v495 = vpack.c.b16 %v457, %v455
  %v496 = vpack.c.b16 %v460, %v458
  %v497 = vpack.c.b16 %v461, %v459
  %v498 = vpack.c.b16 %v464, %v462
  %v499 = vpack.c.b16 %v465, %v463
  %v500 = vpack.c.b16 %v468, %v466
  %v501 = vpack.c.b16 %v469, %v467
  %534 = vmatprep.subr.bf16.mxu0 %v485
  %535 = vmatpush1.bf16.msra.mxu0 %v484
  %536 = vmatprep.subr.bf16.mxu0 %v483
  %537 = vmatpush1.bf16.msra.mxu0 %v482
  %538 = vmatprep.subr.bf16.mxu0 %v481
  %539 = vmatpush1.bf16.msra.mxu0 %v480
  %540 = vmatprep.subr.bf16.mxu0 %v479
  %541 = vmatpush1.bf16.msra.mxu0 %v478
  %542 = vmatprep.subr.bf16.mxu0 %v477
  %543 = vmatpush1.bf16.msra.mxu0 %v476
  %544 = vmatprep.subr.bf16.mxu0 %v475
  %545 = vmatpush1.bf16.msra.mxu0 %v474
  %546 = vmatprep.subr.bf16.mxu0 %v473
  %547 = vmatpush1.bf16.msra.mxu0 %v472
  %548 = vmatprep.subr.bf16.mxu0 %v471
  %549 = vmatpush1.bf16.msra.mxu0 %v470
  %550 = vmatprep.subr.bf16.mxu0 %v501
  %551 = vmatpush2.bf16.msra.mxu0 %v500
  %552 = vmatprep.subr.bf16.mxu0 %v499
  %553 = vmatpush2.bf16.msra.mxu0 %v498
  %554 = vmatprep.subr.bf16.mxu0 %v497
  %555 = vmatpush2.bf16.msra.mxu0 %v496
  %556 = vmatprep.subr.bf16.mxu0 %v495
  %557 = vmatpush2.bf16.msra.mxu0 %v494
  %558 = vmatprep.subr.bf16.mxu0 %v493
  %559 = vmatpush2.bf16.msra.mxu0 %v492
  %560 = vmatprep.subr.bf16.mxu0 %v491
  %561 = vmatpush2.bf16.msra.mxu0 %v490
  %562 = vmatprep.subr.bf16.mxu0 %v489
  %563 = vmatpush2.bf16.msra.mxu0 %v488
  %564 = vmatprep.subr.bf16.mxu0 %v487
  %565 = vmatpush2.bf16.msra.mxu0 %v486
  %566 = vmatprep.mubr.bf16.mxu0 %v325
  %567 = vmatmul.mubr.bf16.gmra.mxu0 %v324
  %v568 = vpop.f32.mrf.mxu0
  %v569 = vadd.f32 %v367, %v568
  %v570 = vpop.f32.mrf.mxu0
  %v571 = vadd.f32 %v371, %v570
  %v572 = vpop.f32.mrf.mxu0
  %v573 = vadd.f32 %v367, %v572
  %v574 = vpop.f32.mrf.mxu0
  %v575 = vadd.f32 %v371, %v574
  %576 = vmatprep.mubr.bf16.mxu0 %v327
  %577 = vmatmul.mubr.bf16.gmra.mxu0 %v326
  %v578 = vpop.f32.mrf.mxu0
  %v579 = vadd.f32 %v367, %v578
  %v580 = vpop.f32.mrf.mxu0
  %v581 = vadd.f32 %v371, %v580
  %v582 = vpop.f32.mrf.mxu0
  %v583 = vadd.f32 %v367, %v582
  %v584 = vpop.f32.mrf.mxu0
  %v585 = vadd.f32 %v371, %v584
  %586 = vmatprep.mubr.bf16.mxu0 %v329
  %587 = vmatmul.mubr.bf16.gmra.mxu0 %v328
  %v588 = vpop.f32.mrf.mxu0
  %v589 = vadd.f32 %v367, %v588
  %v590 = vpop.f32.mrf.mxu0
  %v591 = vadd.f32 %v371, %v590
  %v592 = vpop.f32.mrf.mxu0
  %v593 = vadd.f32 %v367, %v592
  %v594 = vpop.f32.mrf.mxu0
  %v595 = vadd.f32 %v371, %v594
  %596 = vdwg.mxu0
  %v597 = vmax.f32 %v569, 0.0
  %v598 = vmax.f32 %v571, 0.0
  %v599 = vmax.f32 %v573, 0.0
  %v600 = vmax.f32 %v575, 0.0
  %v601 = vmax.f32 %v579, 0.0
  %v602 = vmax.f32 %v581, 0.0
  %v603 = vmax.f32 %v583, 0.0
  %v604 = vmax.f32 %v585, 0.0
  %v605 = vmax.f32 %v589, 0.0
  %v606 = vmax.f32 %v591, 0.0
  %v607 = vmax.f32 %v593, 0.0
  %v608 = vmax.f32 %v595, 0.0
  %v609 = vpack.c.bf16 %v599, %v597
  %v610 = vpack.c.bf16 %v600, %v598
  %v611 = vpack.c.bf16 %v603, %v601
  %v612 = vpack.c.bf16 %v604, %v602
  %v613 = vpack.c.bf16 %v607, %v605
  %v614 = vpack.c.bf16 %v608, %v606
  %v615 = vld [vmem:[%s5] sm:$0xf]
  %v616 = vld [vmem:[%s5 + $0x4] sm:$0xf]
  %v617 = vld [vmem:[%s5 + $0x8] sm:$0xf]
  %v618 = vld [vmem:[%s5 + $0xc] sm:$0xf]
  %v619 = vld [vmem:[%s5 + $0x10] sm:$0xf]
  %v620 = vld [vmem:[%s5 + $0x14] sm:$0xf]
  %v621 = vld [vmem:[%s5 + $0x18] sm:$0xf]
  %v622 = vld [vmem:[%s5 + $0x1c] sm:$0xf]
  %v623 = vld [vmem:[%s5 + $0x20] sm:$0xf]
  %v624 = vld [vmem:[%s5 + $0x24] sm:$0xf]
  %v625 = vld [vmem:[%s5 + $0x28] sm:$0xf]
  %v626 = vld [vmem:[%s5 + $0x2c] sm:$0xf]
  %v627 = vld [vmem:[%s5 + $0x30] sm:$0xf]
  %v628 = vld [vmem:[%s5 + $0x34] sm:$0xf]
  %v629 = vld [vmem:[%s5 + $0x38] sm:$0xf]
  %v630 = vld [vmem:[%s5 + $0x3c] sm:$0xf]
  %v631 = vld [vmem:[%s5 + $0x40] sm:$0xf]
  %v632 = vld [vmem:[%s5 + $0x44] sm:$0xf]
  %v633 = vld [vmem:[%s5 + $0x48] sm:$0xf]
  %v634 = vld [vmem:[%s5 + $0x4c] sm:$0xf]
  %v635 = vld [vmem:[%s5 + $0x50] sm:$0xf]
  %v636 = vld [vmem:[%s5 + $0x54] sm:$0xf]
  %v637 = vld [vmem:[%s5 + $0x58] sm:$0xf]
  %v638 = vld [vmem:[%s5 + $0x5c] sm:$0xf]
  %v639 = vld [vmem:[%s5 + $0x60] sm:$0xf]
  %v640 = vld [vmem:[%s5 + $0x64] sm:$0xf]
  %v641 = vld [vmem:[%s5 + $0x68] sm:$0xf]
  %v642 = vld [vmem:[%s5 + $0x6c] sm:$0xf]
  %v643 = vld [vmem:[%s5 + $0x70] sm:$0xf]
  %v644 = vld [vmem:[%s5 + $0x74] sm:$0xf]
  %v645 = vld [vmem:[%s5 + $0x78] sm:$0xf]
  %v646 = vld [vmem:[%s5 + $0x7c] sm:$0xf]
  %v647 = vld [vmem:[%s6] sm:$0x1]
  %v649 = vlaneseq
  %v650 = vshrl.u32 %v649, 7
  %v651 = vsub.s32 0, %v650
  %v652 = vrot.slane %v647, %v651
  %v686 = vunpack.c.l.b16 %v615
  %v687 = vunpack.c.l.b16 %v616
  %v688 = vunpack.c.l.b16 %v617
  %v689 = vunpack.c.l.b16 %v618
  %v690 = vunpack.c.l.b16 %v619
  %v691 = vunpack.c.l.b16 %v620
  %v692 = vunpack.c.l.b16 %v621
  %v693 = vunpack.c.l.b16 %v622
  %v694 = vunpack.c.l.b16 %v623
  %v695 = vunpack.c.l.b16 %v624
  %v696 = vunpack.c.l.b16 %v625
  %v697 = vunpack.c.l.b16 %v626
  %v698 = vunpack.c.l.b16 %v627
  %v699 = vunpack.c.l.b16 %v628
  %v700 = vunpack.c.l.b16 %v629
  %v701 = vunpack.c.l.b16 %v630
  %v702 = vunpack.c.l.b16 %v631
  %v703 = vunpack.c.l.b16 %v632
  %v704 = vunpack.c.l.b16 %v633
  %v705 = vunpack.c.l.b16 %v634
  %v706 = vunpack.c.l.b16 %v635
  %v707 = vunpack.c.l.b16 %v636
  %v708 = vunpack.c.l.b16 %v637
  %v709 = vunpack.c.l.b16 %v638
  %v710 = vunpack.c.l.b16 %v639
  %v711 = vunpack.c.l.b16 %v640
  %v712 = vunpack.c.l.b16 %v641
  %v713 = vunpack.c.l.b16 %v642
  %v714 = vunpack.c.l.b16 %v643
  %v715 = vunpack.c.l.b16 %v644
  %v716 = vunpack.c.l.b16 %v645
  %v717 = vunpack.c.l.b16 %v646
  %v718 = vpack.c.b16 %v687, %v686
  %v719 = vpack.c.b16 %v689, %v688
  %v720 = vpack.c.b16 %v691, %v690
  %v721 = vpack.c.b16 %v693, %v692
  %v722 = vpack.c.b16 %v695, %v694
  %v723 = vpack.c.b16 %v697, %v696
  %v724 = vpack.c.b16 %v699, %v698
  %v725 = vpack.c.b16 %v701, %v700
  %v726 = vpack.c.b16 %v703, %v702
  %v727 = vpack.c.b16 %v705, %v704
  %v728 = vpack.c.b16 %v707, %v706
  %v729 = vpack.c.b16 %v709, %v708
  %v730 = vpack.c.b16 %v711, %v710
  %v731 = vpack.c.b16 %v713, %v712
  %v732 = vpack.c.b16 %v715, %v714
  %v733 = vpack.c.b16 %v717, %v716
  %750 = vmatprep.subr.bf16.mxu0 0
  %751 = vmatpush1.bf16.msra.mxu0 %v725
  %752 = vmatprep.subr.bf16.mxu0 0
  %753 = vmatpush1.bf16.msra.mxu0 %v724
  %754 = vmatprep.subr.bf16.mxu0 0
  %755 = vmatpush1.bf16.msra.mxu0 %v723
  %756 = vmatprep.subr.bf16.mxu0 0
  %757 = vmatpush1.bf16.msra.mxu0 %v722
  %758 = vmatprep.subr.bf16.mxu0 0
  %759 = vmatpush1.bf16.msra.mxu0 %v721
  %760 = vmatprep.subr.bf16.mxu0 0
  %761 = vmatpush1.bf16.msra.mxu0 %v720
  %762 = vmatprep.subr.bf16.mxu0 0
  %763 = vmatpush1.bf16.msra.mxu0 %v719
  %764 = vmatprep.subr.bf16.mxu0 0
  %765 = vmatpush1.bf16.msra.mxu0 %v718
  %766 = vmatprep.subr.bf16.mxu0 0
  %767 = vmatpush2.bf16.msra.mxu0 %v733
  %768 = vmatprep.subr.bf16.mxu0 0
  %769 = vmatpush2.bf16.msra.mxu0 %v732
  %770 = vmatprep.subr.bf16.mxu0 0
  %771 = vmatpush2.bf16.msra.mxu0 %v731
  %772 = vmatprep.subr.bf16.mxu0 0
  %773 = vmatpush2.bf16.msra.mxu0 %v730
  %774 = vmatprep.subr.bf16.mxu0 0
  %775 = vmatpush2.bf16.msra.mxu0 %v729
  %776 = vmatprep.subr.bf16.mxu0 0
  %777 = vmatpush2.bf16.msra.mxu0 %v728
  %778 = vmatprep.subr.bf16.mxu0 0
  %779 = vmatpush2.bf16.msra.mxu0 %v727
  %780 = vmatprep.subr.bf16.mxu0 0
  %781 = vmatpush2.bf16.msra.mxu0 %v726
  %782 = vmatprep.mubr.bf16.mxu0 %v610
  %783 = vmatmul.mubr.bf16.gmra.mxu0 %v609
  %v784 = vpop.f32.mrf.mxu0
  %v785 = vadd.f32 %v652, %v784
  %v786 = vpop.f32.mrf.mxu0
  %v787 = vpop.f32.mrf.mxu0
  %v788 = vadd.f32 %v652, %v787
  %v789 = vpop.f32.mrf.mxu0
  %790 = vmatprep.mubr.bf16.mxu0 %v612
  %791 = vmatmul.mubr.bf16.gmra.mxu0 %v611
  %v792 = vpop.f32.mrf.mxu0
  %v793 = vadd.f32 %v652, %v792
  %v794 = vpop.f32.mrf.mxu0
  %v795 = vpop.f32.mrf.mxu0
  %v796 = vadd.f32 %v652, %v795
  %v797 = vpop.f32.mrf.mxu0
  %798 = vmatprep.mubr.bf16.mxu0 %v614
  %799 = vmatmul.mubr.bf16.gmra.mxu0 %v613
  %v800 = vpop.f32.mrf.mxu0
  %v801 = vadd.f32 %v652, %v800
  %v802 = vpop.f32.mrf.mxu0
  %v803 = vpop.f32.mrf.mxu0
  %v804 = vadd.f32 %v652, %v803
  %v805 = vpop.f32.mrf.mxu0
  %806 = vdwg.mxu0
  %807 = vst [vmem:[%s7] sm:$0xff] %v785
  %808 = vst [vmem:[%s7 + $0x8] sm:$0xff] %v788
  %809 = vst [vmem:[%s7 + $0x10] sm:$0xff] %v793
  %810 = vst [vmem:[%s7 + $0x18] sm:$0xff] %v796
  %811 = vst [vmem:[%s7 + $0x20] sm:$0xff] %v801
  %812 = vst [vmem:[%s7 + $0x28] sm:$0xff] %v804
  // Predicated region
  $region30: #{mazenet_forward.1} parent=0 // pred_check
    _
  $region31: #{mazenet_forward.1} parent=0 // pred_check_branch
    %814 = sbr.rel (0) target = $region33
  $region32: #{mazenet_forward.1} parent=0 // pred_region
    _
  $region33: #{mazenet_forward.1} parent=0 // pred_fallthru
    _
  // Predicated region
  $region34: #{mazenet_forward.1} parent=0 // pred_check
    _
  $region35: #{mazenet_forward.1} parent=0 // pred_check_branch
    %816 = sbr.rel (0) target = $region37
  $region36: #{mazenet_forward.1} parent=0 // pred_region
    _
  $region37: #{mazenet_forward.1} parent=0 // pred_fallthru
    _

</llo_original>
